<compile_context>
chip_gen: v5e
topology: v5e:2x2
jax: 0.10.0
libtpu: 0.0.40
codegen_flags: <defaults>
</compile_context>

<pallas_src>
import functools

import jax
import jax.numpy as jnp
from jax.experimental import pallas as pl
from jax.experimental.pallas import tpu as pltpu

LANE = 128
SUBLANE = 8


# ----------------------------- Pallas kernel --------------------------------
def gcn_d_fused_kernel(a_ref, x_ref, w1_ref, b1_ref, w2_ref, b2_ref, o_ref):
    # a_ref  : (Np, Np)     normalized adjacency (zero-padded)
    # x_ref  : (Np, Ep)     node embeddings      (zero-padded)
    # w1_ref : (Ep, D1p)    conv1 weight         (zero-padded)
    # b1_ref : (1,  D1p)    conv1 bias
    # w2_ref : (D1p, D2p)   conv2 weight         (zero-padded)
    # b2_ref : (1,  D2p)    conv2 bias
    # o_ref  : (Np, D2p)    output (lane-dense, padded)
    a = a_ref[...]

    # layer 1: relu( Ahat @ (X @ W1) + b1 )   -- XW computed exactly once
    xw1 = jnp.dot(x_ref[...], w1_ref[...], preferred_element_type=jnp.float32)
    h1 = jnp.maximum(
        jnp.dot(a, xw1, preferred_element_type=jnp.float32) + b1_ref[...], 0.0)

    # layer 2: relu( Ahat @ (H1 @ W2) + b2 )
    xw2 = jnp.dot(h1, w2_ref[...], preferred_element_type=jnp.float32)
    h2 = jnp.maximum(
        jnp.dot(a, xw2, preferred_element_type=jnp.float32) + b2_ref[...], 0.0)

    o_ref[...] = h2.astype(o_ref.dtype)


# ------------------------------ wrapper --------------------------------------
def _round_up(v, m):
    return (v + m - 1) // m * m


def _pad2(x, rows, cols):
    r, c = x.shape
    return jnp.pad(x, ((0, rows - r), (0, cols - c)))


def gcn_d_forward(ahat, emb, w1, b1, w2, b2):
    """Fused two-layer GCN forward. Fits entirely in VMEM at these shapes."""
    n = ahat.shape[0]
    emb_dim = emb.shape[1]
    dim1 = w1.shape[1]
    dim2 = w2.shape[1]

    # Pad to sublane/lane-aligned shapes (lane-dense output is the big lever
    # for tiny kernels: unmasked full-width vector stores).
    n_p = _round_up(n, SUBLANE)
    e_p = _round_up(emb_dim, LANE)
    d1_p = _round_up(dim1, LANE)
    d2_p = _round_up(dim2, LANE)

    ahat_p = _pad2(ahat, n_p, n_p)
    emb_p = _pad2(emb, n_p, e_p)
    w1_p = _pad2(w1, e_p, d1_p)
    b1_p = _pad2(b1, 1, d1_p)
    w2_p = _pad2(w2, d1_p, d2_p)
    b2_p = _pad2(b2, 1, d2_p)

    out_p = pl.pallas_call(
        gcn_d_fused_kernel,
        out_shape=jax.ShapeDtypeStruct((n_p, d2_p), jnp.float32),
        grid_spec=pltpu.PrefetchScalarGridSpec(
            num_scalar_prefetch=0,
            grid=(1,),  # single fused step: whole problem lives in VMEM
            in_specs=[
                pl.BlockSpec((n_p, n_p), lambda i: (0, 0)),     # Ahat
                pl.BlockSpec((n_p, e_p), lambda i: (0, 0)),     # node emb
                pl.BlockSpec((e_p, d1_p), lambda i: (0, 0)),    # W1
                pl.BlockSpec((1, d1_p), lambda i: (0, 0)),      # b1
                pl.BlockSpec((d1_p, d2_p), lambda i: (0, 0)),   # W2
                pl.BlockSpec((1, d2_p), lambda i: (0, 0)),      # b2
            ],
            out_specs=pl.BlockSpec((n_p, d2_p), lambda i: (0, 0)),
        ),
        compiler_params=pltpu.CompilerParams(
            dimension_semantics=("arbitrary",),
        ),
    )(ahat_p, emb_p, w1_p, b1_p, w2_p, b2_p)

    # Drop padding.
    return out_p[:n, :dim2]


# ------------------------------ glue (plain JAX) -----------------------------
def xavier_uniform(key, shape):
    fan_out, fan_in = shape[0], shape[1]
    bound = jnp.sqrt(6.0 / (fan_in + fan_out))
    return jax.random.uniform(key, shape, jnp.float32, -bound, bound)


def build_normalized_adjacency(edge_index, num_nodes):
    # PyG GCNConv gcn_norm: add self-loops, deg = in-degree at the target node,
    # Ahat[dst, src] = deg^{-1/2}[dst] * A[dst, src] * deg^{-1/2}[src].
    src, dst = edge_index[0], edge_index[1]
    a = jnp.zeros((num_nodes, num_nodes), jnp.float32).at[dst, src].set(1.0)
    a = a + jnp.eye(num_nodes, dtype=jnp.float32)      # self loops
    deg = a.sum(axis=1)                                # in-degree (incl. self)
    dinv = jnp.where(deg > 0, jax.lax.rsqrt(deg), 0.0)
    return dinv[:, None] * a * dinv[None, :]


# ---------------------------------- main -------------------------------------
if __name__ == "__main__":
    # Small shapes consistent with GCN_D.__init__
    type_num, rel_num = 12, 4
    emb_dim, dim1, dim2 = 32, 64, 32
    n_nodes = type_num + rel_num              # 16

    key = jax.random.PRNGKey(0)
    k_emb, k_w1, k_w2 = jax.random.split(key, 3)

    # Parameters (matching init_weight: xavier weights, zero bias)
    node_embedding = xavier_uniform(k_emb, (n_nodes, emb_dim))
    w1 = xavier_uniform(k_w1, (dim1, emb_dim)).T   # GCNConv weight (in, out)
    w2 = xavier_uniform(k_w2, (dim2, dim1)).T
    b1 = jnp.zeros((1, dim1), jnp.float32)
    b2 = jnp.zeros((1, dim2), jnp.float32)

    # Deterministic edge_index: bidirectional ring over all nodes, shape (2, E)
    idx = jnp.arange(n_nodes)
    src = jnp.concatenate([idx, (idx + 1) % n_nodes])
    dst = jnp.concatenate([(idx + 1) % n_nodes, idx])
    edge_index = jnp.stack([src, dst], axis=0)

    ahat = build_normalized_adjacency(edge_index, n_nodes)

    fwd = jax.jit(gcn_d_forward)
    out = fwd(ahat, node_embedding, w1, b1, w2, b2)
    out = jax.block_until_ready(out)

    # Pure-JAX reference check
    ref1 = jnp.maximum(ahat @ (node_embedding @ w1) + b1, 0.0)
    ref2 = jnp.maximum(ahat @ (ref1 @ w2) + b2, 0.0)
    assert out.shape == (n_nodes, dim2)
    assert jnp.allclose(out, ref2, atol=1e-5, rtol=1e-5)

    print("KERNEL_OK")
</pallas_src>

<mosaic_0001>
module attributes {stable_mosaic.version = 11 : i64} {
  func.func @gcn_d_fused_kernel(%arg0: i32, %arg1: memref<16x16xf32, #tpu.memory_space<vmem>>, %arg2: memref<16x128xf32, #tpu.memory_space<vmem>>, %arg3: memref<128x128xf32, #tpu.memory_space<vmem>>, %arg4: memref<1x128xf32, #tpu.memory_space<vmem>>, %arg5: memref<128x128xf32, #tpu.memory_space<vmem>>, %arg6: memref<1x128xf32, #tpu.memory_space<vmem>>, %arg7: memref<16x128xf32, #tpu.memory_space<vmem>>) attributes {dimension_semantics = [#tpu.dimension_semantics<arbitrary>], iteration_bounds = array<i64: 1>, scalar_prefetch = 0 : i64, scratch_operands = 0 : i64, tpu.core_type = #tpu.core_type<tc>, window_params = [{pipeline_mode = #tpu.pipeline_mode<synchronous>, transform_indices = @transform_0, window_bounds = array<i64: 16, 16>}, {pipeline_mode = #tpu.pipeline_mode<synchronous>, transform_indices = @transform_1, window_bounds = array<i64: 16, 128>}, {pipeline_mode = #tpu.pipeline_mode<synchronous>, transform_indices = @transform_2, window_bounds = array<i64: 128, 128>}, {pipeline_mode = #tpu.pipeline_mode<synchronous>, transform_indices = @transform_3, window_bounds = array<i64: 1, 128>}, {pipeline_mode = #tpu.pipeline_mode<synchronous>, transform_indices = @transform_4, window_bounds = array<i64: 128, 128>}, {pipeline_mode = #tpu.pipeline_mode<synchronous>, transform_indices = @transform_5, window_bounds = array<i64: 1, 128>}, {pipeline_mode = #tpu.pipeline_mode<synchronous>, transform_indices = @transform_6, window_bounds = array<i64: 16, 128>}]} {
    %c0 = arith.constant 0 : index
    %c0_0 = arith.constant 0 : index
    %0 = vector.load %arg1[%c0, %c0_0] : memref<16x16xf32, #tpu.memory_space<vmem>>, vector<16x16xf32>
    %c0_1 = arith.constant 0 : index
    %c0_2 = arith.constant 0 : index
    %1 = vector.load %arg2[%c0_1, %c0_2] : memref<16x128xf32, #tpu.memory_space<vmem>>, vector<16x128xf32>
    %c0_3 = arith.constant 0 : index
    %c0_4 = arith.constant 0 : index
    %2 = vector.load %arg3[%c0_3, %c0_4] : memref<128x128xf32, #tpu.memory_space<vmem>>, vector<128x128xf32>
    %cst = arith.constant dense<0.000000e+00> : vector<16x128xf32>
    %3 = tpu.matmul %1, %2, %cst {dimension_numbers = #tpu.dot_dimension_numbers<[1], [0], [0], [1], [0, 0, 1, 1], [], []>} : vector<16x128xf32>, vector<128x128xf32>, vector<16x128xf32> -> vector<16x128xf32>
    %cst_5 = arith.constant dense<0.000000e+00> : vector<16x128xf32>
    %4 = tpu.matmul %0, %3, %cst_5 {dimension_numbers = #tpu.dot_dimension_numbers<[1], [0], [0], [1], [0, 0, 1, 1], [], []>} : vector<16x16xf32>, vector<16x128xf32>, vector<16x128xf32> -> vector<16x128xf32>
    %c0_6 = arith.constant 0 : index
    %c0_7 = arith.constant 0 : index
    %5 = vector.load %arg4[%c0_6, %c0_7] : memref<1x128xf32, #tpu.memory_space<vmem>>, vector<1x128xf32>
    %6 = vector.broadcast %5 : vector<1x128xf32> to vector<16x128xf32>
    %7 = arith.addf %4, %6 : vector<16x128xf32>
    %cst_8 = arith.constant 0.000000e+00 : f32
    %8 = vector.broadcast %cst_8 : f32 to vector<16x128xf32>
    %9 = arith.maximumf %7, %8 : vector<16x128xf32>
    %c0_9 = arith.constant 0 : index
    %c0_10 = arith.constant 0 : index
    %10 = vector.load %arg5[%c0_9, %c0_10] : memref<128x128xf32, #tpu.memory_space<vmem>>, vector<128x128xf32>
    %cst_11 = arith.constant dense<0.000000e+00> : vector<16x128xf32>
    %11 = tpu.matmul %9, %10, %cst_11 {dimension_numbers = #tpu.dot_dimension_numbers<[1], [0], [0], [1], [0, 0, 1, 1], [], []>} : vector<16x128xf32>, vector<128x128xf32>, vector<16x128xf32> -> vector<16x128xf32>
    %cst_12 = arith.constant dense<0.000000e+00> : vector<16x128xf32>
    %12 = tpu.matmul %0, %11, %cst_12 {dimension_numbers = #tpu.dot_dimension_numbers<[1], [0], [0], [1], [0, 0, 1, 1], [], []>} : vector<16x16xf32>, vector<16x128xf32>, vector<16x128xf32> -> vector<16x128xf32>
    %c0_13 = arith.constant 0 : index
    %c0_14 = arith.constant 0 : index
    %13 = vector.load %arg6[%c0_13, %c0_14] : memref<1x128xf32, #tpu.memory_space<vmem>>, vector<1x128xf32>
    %14 = vector.broadcast %13 : vector<1x128xf32> to vector<16x128xf32>
    %15 = arith.addf %12, %14 : vector<16x128xf32>
    %cst_15 = arith.constant 0.000000e+00 : f32
    %16 = vector.broadcast %cst_15 : f32 to vector<16x128xf32>
    %17 = arith.maximumf %15, %16 : vector<16x128xf32>
    %c0_16 = arith.constant 0 : index
    %c0_17 = arith.constant 0 : index
    %18 = vector.load %arg7[%c0_16, %c0_17] : memref<16x128xf32, #tpu.memory_space<vmem>>, vector<16x128xf32>
    tpu.vector_store %arg7[%c0_16, %c0_17], %17 {strides = array<i32>} : memref<16x128xf32, #tpu.memory_space<vmem>>, vector<16x128xf32>,
    return
  }
  func.func @transform_0(%arg0: i32) -> (i32, i32) {
    %c0_i32 = arith.constant 0 : i32
    %c0_i32_0 = arith.constant 0 : i32
    %c0_i32_1 = arith.constant 0 : i32
    return %c0_i32, %c0_i32_0 : i32, i32
  }
  func.func @transform_1(%arg0: i32) -> (i32, i32) {
    %c0_i32 = arith.constant 0 : i32
    %c0_i32_0 = arith.constant 0 : i32
    %c0_i32_1 = arith.constant 0 : i32
    return %c0_i32, %c0_i32_0 : i32, i32
  }
  func.func @transform_2(%arg0: i32) -> (i32, i32) {
    %c0_i32 = arith.constant 0 : i32
    %c0_i32_0 = arith.constant 0 : i32
    %c0_i32_1 = arith.constant 0 : i32
    return %c0_i32, %c0_i32_0 : i32, i32
  }
  func.func @transform_3(%arg0: i32) -> (i32, i32) {
    %c0_i32 = arith.constant 0 : i32
    %c0_i32_0 = arith.constant 0 : i32
    %c0_i32_1 = arith.constant 0 : i32
    return %c0_i32, %c0_i32_0 : i32, i32
  }
  func.func @transform_4(%arg0: i32) -> (i32, i32) {
    %c0_i32 = arith.constant 0 : i32
    %c0_i32_0 = arith.constant 0 : i32
    %c0_i32_1 = arith.constant 0 : i32
    return %c0_i32, %c0_i32_0 : i32, i32
  }
  func.func @transform_5(%arg0: i32) -> (i32, i32) {
    %c0_i32 = arith.constant 0 : i32
    %c0_i32_0 = arith.constant 0 : i32
    %c0_i32_1 = arith.constant 0 : i32
    return %c0_i32, %c0_i32_0 : i32, i32
  }
  func.func @transform_6(%arg0: i32) -> (i32, i32) {
    %c0_i32 = arith.constant 0 : i32
    %c0_i32_0 = arith.constant 0 : i32
    %c0_i32_1 = arith.constant 0 : i32
    return %c0_i32, %c0_i32_0 : i32, i32
  }
}

</mosaic_0001>

<llo_original>
// kernel: gcn_d_forward.1
$region0: #{gcn_d_forward.1}
  #allocation0 [shape = 'u32[]', space=smem, size = 0x4, offset = 0x4, fixed_abs, tag = 'smem constant byte address 0x4 - core index']
  #allocation1 [shape = 'u32[72,128]{1,0:T(1,128)}', space=vmem, size = 0x9000, scoped, tag = 'internal scratch']
  %s0 = inlined_call_operand.vmem [shape: f32[16,16], index: 0, kind: input, shape index: {}]
  %s1 = inlined_call_operand.vmem [shape: f32[16,128], index: 1, kind: input, shape index: {}]
  %s2 = inlined_call_operand.vmem [shape: f32[128,128], index: 2, kind: input, shape index: {}]
  %s3 = inlined_call_operand.vmem [shape: f32[1,128], index: 3, kind: input, shape index: {}]
  %s4 = inlined_call_operand.vmem [shape: f32[128,128], index: 4, kind: input, shape index: {}]
  %s5 = inlined_call_operand.vmem [shape: f32[1,128], index: 5, kind: input, shape index: {}]
  %s6 = inlined_call_operand.hbm [shape: f32[16,128], index: 6, kind: output, shape index: {}]
  %s7 = sld [smem:[#allocation0]]
  $region34: #{gcn_d_forward.1} parent=0
    _
  %s9 = ssub.s32 1, %s7
  %s10 = scalar_select 0, %s9, %s7
  $region1: #{gcn_d_forward.1} parent=0
    #allocation2 [shape = 'u8[8192]{0}', space=vmem, size = 0x2000, scoped, tag = 'output window, operand 0, single buffered']
    #allocation3 [shape = 's32[1]{0}', space=sflag, size = 0x4, scoped, tag = 'scoped memory for gcn_d_forward.1']
    %11 = vsyncpa [#allocation3], 0
    // Predicated region
    $region2: #{gcn_d_forward.1} parent=1 // pred_check
      _
    $region3: #{gcn_d_forward.1} parent=1 // pred_check_branch
      %13 = sbr.rel (0) target = $region5
    $region4: #{gcn_d_forward.1} parent=1 // pred_region
      _
    $region5: #{gcn_d_forward.1} parent=1 // pred_fallthru
      _
    // Predicated region
    $region6: #{gcn_d_forward.1} parent=1 // pred_check
      _
    $region7: #{gcn_d_forward.1} parent=1 // pred_check_branch
      %15 = sbr.rel (0) target = $region9
    $region8: #{gcn_d_forward.1} parent=1 // pred_region
      _
    $region9: #{gcn_d_forward.1} parent=1 // pred_fallthru
      _
    // Predicated region
    $region10: #{gcn_d_forward.1} parent=1 // pred_check
      _
    $region11: #{gcn_d_forward.1} parent=1 // pred_check_branch
      %17 = sbr.rel (0) target = $region13
    $region12: #{gcn_d_forward.1} parent=1 // pred_region
      _
    $region13: #{gcn_d_forward.1} parent=1 // pred_fallthru
      _
    // Predicated region
    $region14: #{gcn_d_forward.1} parent=1 // pred_check
      _
    $region15: #{gcn_d_forward.1} parent=1 // pred_check_branch
      %19 = sbr.rel (0) target = $region17
    $region16: #{gcn_d_forward.1} parent=1 // pred_region
      _
    $region17: #{gcn_d_forward.1} parent=1 // pred_fallthru
      _
    // Predicated region
    $region18: #{gcn_d_forward.1} parent=1 // pred_check
      _
    $region19: #{gcn_d_forward.1} parent=1 // pred_check_branch
      %21 = sbr.rel (0) target = $region21
    $region20: #{gcn_d_forward.1} parent=1 // pred_region
      _
    $region21: #{gcn_d_forward.1} parent=1 // pred_fallthru
      _
    // Predicated region
    $region22: #{gcn_d_forward.1} parent=1 // pred_check
      _
    $region23: #{gcn_d_forward.1} parent=1 // pred_check_branch
      %23 = sbr.rel (0) target = $region25
    $region24: #{gcn_d_forward.1} parent=1 // pred_region
      _
    $region25: #{gcn_d_forward.1} parent=1 // pred_fallthru
      _
    %v24 = vld [vmem:[%s0] sm:$0xff]
    %v25 = vld [vmem:[%s0 + $0x8] sm:$0xff]
    %v26 = vld [vmem:[%s1] sm:$0xff]
    %v27 = vld [vmem:[%s1 + $0x8] sm:$0xff]
    %v28 = vld [vmem:[%s2] sm:$0xff]
    %v29 = vld [vmem:[%s2 + $0x8] sm:$0xff]
    %v30 = vld [vmem:[%s2 + $0x10] sm:$0xff]
    %v31 = vld [vmem:[%s2 + $0x18] sm:$0xff]
    %v32 = vld [vmem:[%s2 + $0x20] sm:$0xff]
    %v33 = vld [vmem:[%s2 + $0x28] sm:$0xff]
    %v34 = vld [vmem:[%s2 + $0x30] sm:$0xff]
    %v35 = vld [vmem:[%s2 + $0x38] sm:$0xff]
    %v36 = vld [vmem:[%s2 + $0x40] sm:$0xff]
    %v37 = vld [vmem:[%s2 + $0x48] sm:$0xff]
    %v38 = vld [vmem:[%s2 + $0x50] sm:$0xff]
    %v39 = vld [vmem:[%s2 + $0x58] sm:$0xff]
    %v40 = vld [vmem:[%s2 + $0x60] sm:$0xff]
    %v41 = vld [vmem:[%s2 + $0x68] sm:$0xff]
    %v42 = vld [vmem:[%s2 + $0x70] sm:$0xff]
    %v43 = vld [vmem:[%s2 + $0x78] sm:$0xff]
    %44 = vmatpush.msra.mxu0 %v43
    %45 = vmatpush.msra.mxu0 %v42
    %46 = vmatpush.msra.mxu0 %v41
    %47 = vmatpush.msra.mxu0 %v40
    %48 = vmatpush.msra.mxu0 %v39
    %49 = vmatpush.msra.mxu0 %v38
    %50 = vmatpush.msra.mxu0 %v37
    %51 = vmatpush.msra.mxu0 %v36
    %52 = vmatpush.msra.mxu0 %v35
    %53 = vmatpush.msra.mxu0 %v34
    %54 = vmatpush.msra.mxu0 %v33
    %55 = vmatpush.msra.mxu0 %v32
    %56 = vmatpush.msra.mxu0 %v31
    %57 = vmatpush.msra.mxu0 %v30
    %58 = vmatpush.msra.mxu0 %v29
    %59 = vmatpush.msra.mxu0 %v28
    %60 = vmatmul.f32.gmra.mxu0 %v26
    %v61 = vpop.f32.mrf.mxu0
    %v62 = vadd.f32 0.0, %v61
    %63 = vmatmul.f32.gmra.mxu0 %v27
    %v64 = vpop.f32.mrf.mxu0
    %v65 = vadd.f32 0.0, %v64
    %66 = vdwg.mxu0
    %v67 = vld [vmem:[%s3] sm:$0x1]
    %v69 = vperm.slane %v67, 0
    %vm71 = vcmask 130048
    %v73 = vsel %vm71, %v24, 0
    %v76 = vsel %vm71, %v25, 0
    %78 = vmatpush.msra.mxu0 0.0
    %79 = vmatpush.msra.mxu0 0.0
    %80 = vmatpush.msra.mxu0 0.0
    %81 = vmatpush.msra.mxu0 0.0
    %82 = vmatpush.msra.mxu0 0.0
    %83 = vmatpush.msra.mxu0 0.0
    %84 = vmatpush.msra.mxu0 0.0
    %85 = vmatpush.msra.mxu0 0.0
    %86 = vmatpush.msra.mxu0 0.0
    %87 = vmatpush.msra.mxu0 0.0
    %88 = vmatpush.msra.mxu0 0.0
    %89 = vmatpush.msra.mxu0 0.0
    %90 = vmatpush.msra.mxu0 0.0
    %91 = vmatpush.msra.mxu0 0.0
    %92 = vmatpush.msra.mxu0 %v65
    %93 = vmatpush.msra.mxu0 %v62
    %94 = vmatmul.f32.gmra.mxu0 %v73
    %v95 = vpop.f32.mrf.mxu0
    %v96 = vadd.f32 %v69, %v95
    %97 = vmatmul.f32.gmra.mxu0 %v76
    %v98 = vpop.f32.mrf.mxu0
    %v99 = vadd.f32 %v69, %v98
    %100 = vdwg.mxu0
    %v101 = vmax.f32 %v96, 0.0
    %v102 = vmax.f32 %v99, 0.0
    %v103 = vld [vmem:[%s4] sm:$0xff]
    %v104 = vld [vmem:[%s4 + $0x8] sm:$0xff]
    %v105 = vld [vmem:[%s4 + $0x10] sm:$0xff]
    %v106 = vld [vmem:[%s4 + $0x18] sm:$0xff]
    %v107 = vld [vmem:[%s4 + $0x20] sm:$0xff]
    %v108 = vld [vmem:[%s4 + $0x28] sm:$0xff]
    %v109 = vld [vmem:[%s4 + $0x30] sm:$0xff]
    %v110 = vld [vmem:[%s4 + $0x38] sm:$0xff]
    %v111 = vld [vmem:[%s4 + $0x40] sm:$0xff]
    %v112 = vld [vmem:[%s4 + $0x48] sm:$0xff]
    %v113 = vld [vmem:[%s4 + $0x50] sm:$0xff]
    %v114 = vld [vmem:[%s4 + $0x58] sm:$0xff]
    %v115 = vld [vmem:[%s4 + $0x60] sm:$0xff]
    %v116 = vld [vmem:[%s4 + $0x68] sm:$0xff]
    %v117 = vld [vmem:[%s4 + $0x70] sm:$0xff]
    %v118 = vld [vmem:[%s4 + $0x78] sm:$0xff]
    %119 = vmatpush.msra.mxu0 %v118
    %120 = vmatpush.msra.mxu0 %v117
    %121 = vmatpush.msra.mxu0 %v116
    %122 = vmatpush.msra.mxu0 %v115
    %123 = vmatpush.msra.mxu0 %v114
    %124 = vmatpush.msra.mxu0 %v113
    %125 = vmatpush.msra.mxu0 %v112
    %126 = vmatpush.msra.mxu0 %v111
    %127 = vmatpush.msra.mxu0 %v110
    %128 = vmatpush.msra.mxu0 %v109
    %129 = vmatpush.msra.mxu0 %v108
    %130 = vmatpush.msra.mxu0 %v107
    %131 = vmatpush.msra.mxu0 %v106
    %132 = vmatpush.msra.mxu0 %v105
    %133 = vmatpush.msra.mxu0 %v104
    %134 = vmatpush.msra.mxu0 %v103
    %135 = vmatmul.f32.gmra.mxu0 %v101
    %v136 = vpop.f32.mrf.mxu0
    %v137 = vadd.f32 0.0, %v136
    %138 = vmatmul.f32.gmra.mxu0 %v102
    %v139 = vpop.f32.mrf.mxu0
    %v140 = vadd.f32 0.0, %v139
    %141 = vdwg.mxu0
    %v142 = vld [vmem:[%s5] sm:$0x1]
    %v144 = vperm.slane %v142, 0
    %146 = vmatpush.msra.mxu0 0.0
    %147 = vmatpush.msra.mxu0 0.0
    %148 = vmatpush.msra.mxu0 0.0
    %149 = vmatpush.msra.mxu0 0.0
    %150 = vmatpush.msra.mxu0 0.0
    %151 = vmatpush.msra.mxu0 0.0
    %152 = vmatpush.msra.mxu0 0.0
    %153 = vmatpush.msra.mxu0 0.0
    %154 = vmatpush.msra.mxu0 0.0
    %155 = vmatpush.msra.mxu0 0.0
    %156 = vmatpush.msra.mxu0 0.0
    %157 = vmatpush.msra.mxu0 0.0
    %158 = vmatpush.msra.mxu0 0.0
    %159 = vmatpush.msra.mxu0 0.0
    %160 = vmatpush.msra.mxu0 %v140
    %161 = vmatpush.msra.mxu0 %v137
    %162 = vmatmul.f32.gmra.mxu0 %v73
    %v163 = vpop.f32.mrf.mxu0
    %v164 = vadd.f32 %v144, %v163
    %165 = vmatmul.f32.gmra.mxu0 %v76
    %v166 = vpop.f32.mrf.mxu0
    %v167 = vadd.f32 %v144, %v166
    %168 = vdwg.mxu0
    %v169 = vmax.f32 %v164, 0.0
    %v170 = vmax.f32 %v167, 0.0
    %171 = vst [vmem:[#allocation2] sm:$0xff] %v169
    %172 = vst [vmem:[#allocation2 + $0x8] sm:$0xff] %v170
    // Predicated region
    $region26: #{gcn_d_forward.1} parent=1 // pred_check
      _
    $region27: #{gcn_d_forward.1} parent=1 // pred_check_branch
      %174 = sbr.rel (0) target = $region29
    $region28: #{gcn_d_forward.1} parent=1 // pred_region
      %176 = vsyncadd [#allocation3], 0
      %s177 = sshll.u32 [#allocation2], 4
      %s178 = int_to_ptr.vmem [resolvable:$true] %s177
      %s179 = sshll.u32 %s6, 4
      %s180 = int_to_ptr.hbm [resolvable:$true] %s179
      %185 = dma.vmem_to_hbm [thread:$0]  %s178, 256, %s180, [#allocation3], 128, 128, 8
    $region29: #{gcn_d_forward.1} parent=1 // pred_fallthru
      _
    // Predicated region
    $region30: #{gcn_d_forward.1} parent=1 // pred_check
      _
    $region31: #{gcn_d_forward.1} parent=1 // pred_check_branch
      %187 = sbr.rel (0) target = $region33
    $region32: #{gcn_d_forward.1} parent=1 // pred_region
      %189 = dma.done [#allocation3], 256
    $region33: #{gcn_d_forward.1} parent=1 // pred_fallthru
      _
    %190 = vsyncpa [#allocation3], 1

</llo_original>
